<compile_context>
chip_gen: v6e
topology: v6e:2x2x1
jax: 0.10.0
libtpu: 0.0.40
codegen_flags: <defaults>
</compile_context>

<pallas_src>
import jax
import jax.numpy as jnp
from jax import lax
from jax.experimental import pallas as pl
from jax.experimental.pallas import tpu as pltpu

LANE = 128     # TPU lane width   -> output last dim padded to a multiple of this
SUBLANE = 8    # TPU sublane width -> batch tiles are multiples of this


def _round_up(n, m):
    return (n + m - 1) // m * m


def linear_decoder_kernel(x_ref, w1_ref, b1_ref, w2_ref, b2_ref, o_ref):
    """Fused Linear -> ReLU -> Linear for one batch tile.

    Weights are in PyTorch (out_features, in_features) layout; the MXU
    contracts the trailing dims directly, so no transpose/relayout is needed.
    Matmul inputs are bf16, accumulation / bias / ReLU are f32.
    """
    x = x_ref[...]                                      # (TB, H)   bf16
    # h = x @ W1.T : contract last dim of x with last dim of W1
    h = lax.dot_general(
        x, w1_ref[...],
        dimension_numbers=(((1,), (1,)), ((), ())),
        preferred_element_type=jnp.float32)             # (TB, H)   f32
    h = jnp.maximum(h + b1_ref[...], 0.0)               # bias + ReLU in f32 (VPU)
    # y = h @ W2.T : W2 row-padded to Cp (multiple of 128) -> lane-dense store
    y = lax.dot_general(
        h.astype(w2_ref.dtype), w2_ref[...],
        dimension_numbers=(((1,), (1,)), ((), ())),
        preferred_element_type=jnp.float32)             # (TB, Cp)  f32
    o_ref[...] = (y + b2_ref[...]).astype(o_ref.dtype)


def prepare_params(w1_pt, b1, w2_pt, b2, compute_dtype=jnp.bfloat16):
    """One-time parameter prep (do at init, NOT per forward call):
       keep PyTorch (out, in) layout, pad class dim to a lane-dense multiple
       of 128, and cast matmul operands to bf16."""
    H = w1_pt.shape[0]
    C = w2_pt.shape[0]
    Cp = _round_up(C, LANE)
    w1 = w1_pt.astype(compute_dtype)                                   # (H, H)
    b1_2d = b1.reshape(1, H).astype(jnp.float32)                       # (1, H)
    w2 = jnp.zeros((Cp, H), compute_dtype).at[:C, :].set(
        w2_pt.astype(compute_dtype))                                   # (Cp, H)
    b2_2d = jnp.zeros((1, Cp), jnp.float32).at[:, :C].set(
        b2.astype(jnp.float32))                                        # (1, Cp)
    return w1, b1_2d, w2, b2_2d, C


def linear_decoder(x, w1, b1_2d, w2, b2_2d, num_classes,
                   tile_batch=256, compute_dtype=jnp.bfloat16):
    """x: (B, H) float32. Params as produced by prepare_params."""
    B, H = x.shape
    Cp = w2.shape[0]

    # Batch tile: multiple of 8 sublanes, capped at tile_batch.
    TB = min(tile_batch, _round_up(B, SUBLANE))
    Bp = _round_up(B, TB)

    xb = x.astype(compute_dtype)
    if Bp != B:
        xb = jnp.pad(xb, ((0, Bp - B), (0, 0)))

    out_padded = pl.pallas_call(
        linear_decoder_kernel,
        out_shape=jax.ShapeDtypeStruct((Bp, Cp), jnp.float32),
        grid=(pl.cdiv(Bp, TB),),
        in_specs=[
            pl.BlockSpec((TB, H), lambda i: (i, 0)),    # x : one batch tile/step
            pl.BlockSpec((H, H), lambda i: (0, 0)),     # W1: resident across steps
            pl.BlockSpec((1, H), lambda i: (0, 0)),     # b1: resident
            pl.BlockSpec((Cp, H), lambda i: (0, 0)),    # W2: resident (lane-padded)
            pl.BlockSpec((1, Cp), lambda i: (0, 0)),    # b2: resident (lane-padded)
        ],
        out_specs=pl.BlockSpec((TB, Cp), lambda i: (i, 0)),
        compiler_params=pltpu.CompilerParams(
            dimension_semantics=("parallel",),          # batch tiles -> both TCs on v7x
        ),
    )(xb, w1, b1_2d, w2, b2_2d)

    return out_padded[:B, :num_classes]


if __name__ == "__main__":
    # Small shapes consistent with the module: batch=8, hidden=32, classes=10
    B, H, C = 8, 32, 10

    key = jax.random.PRNGKey(0)
    kx, kw1, kb1, kw2, kb2 = jax.random.split(key, 5)

    x = jax.random.normal(kx, (B, H), dtype=jnp.float32)

    # PyTorch nn.Linear-shaped parameters:
    #   internal_linear.weight: (H, H), bias: (H,)
    #   projective_linear.weight: (C, H), bias: (C,)
    bound1 = 1.0 / (H ** 0.5)
    w1_pt = jax.random.uniform(kw1, (H, H), jnp.float32, -bound1, bound1)
    b1 = jax.random.uniform(kb1, (H,), jnp.float32, -bound1, bound1)
    w2_pt = jax.random.uniform(kw2, (C, H), jnp.float32, -bound1, bound1)
    b2 = jax.random.uniform(kb2, (C,), jnp.float32, -bound1, bound1)

    # One-time param prep (layout / padding / bf16 cast).
    w1, b1_2d, w2, b2_2d, num_classes = prepare_params(w1_pt, b1, w2_pt, b2)

    y = linear_decoder(x, w1, b1_2d, w2, b2_2d, num_classes)
    y = jax.block_until_ready(y)

    # Pure-JAX f32 reference (same math as the PyTorch forward).
    ref = jnp.maximum(x @ w1_pt.T + b1, 0.0) @ w2_pt.T + b2
    assert y.shape == (B, C)
    # bf16 MXU inputs with f32 accumulation -> loosened tolerance.
    assert jnp.allclose(y, ref, atol=2e-2, rtol=2e-2)

    print("KERNEL_OK")
</pallas_src>

<mosaic_0001>
module attributes {stable_mosaic.version = 11 : i64} {
  func.func @linear_decoder_kernel(%arg0: i32, %arg1: memref<8x32xbf16, #tpu.memory_space<vmem>>, %arg2: memref<32x32xbf16, #tpu.memory_space<vmem>>, %arg3: memref<1x32xf32, #tpu.memory_space<vmem>>, %arg4: memref<128x32xbf16, #tpu.memory_space<vmem>>, %arg5: memref<1x128xf32, #tpu.memory_space<vmem>>, %arg6: memref<8x128xf32, #tpu.memory_space<vmem>>) attributes {dimension_semantics = [#tpu.dimension_semantics<parallel>], iteration_bounds = array<i64: 1>, scalar_prefetch = 0 : i64, scratch_operands = 0 : i64, tpu.core_type = #tpu.core_type<tc>, window_params = [{transform_indices = @transform_0, window_bounds = array<i64: 8, 32>}, {pipeline_mode = #tpu.pipeline_mode<synchronous>, transform_indices = @transform_1, window_bounds = array<i64: 32, 32>}, {pipeline_mode = #tpu.pipeline_mode<synchronous>, transform_indices = @transform_2, window_bounds = array<i64: 1, 32>}, {pipeline_mode = #tpu.pipeline_mode<synchronous>, transform_indices = @transform_3, window_bounds = array<i64: 128, 32>}, {pipeline_mode = #tpu.pipeline_mode<synchronous>, transform_indices = @transform_4, window_bounds = array<i64: 1, 128>}, {transform_indices = @transform_5, window_bounds = array<i64: 8, 128>}]} {
    %c0 = arith.constant 0 : index
    %c0_0 = arith.constant 0 : index
    %0 = vector.load %arg1[%c0, %c0_0] : memref<8x32xbf16, #tpu.memory_space<vmem>>, vector<8x32xbf16>
    %c0_1 = arith.constant 0 : index
    %c0_2 = arith.constant 0 : index
    %1 = vector.load %arg2[%c0_1, %c0_2] : memref<32x32xbf16, #tpu.memory_space<vmem>>, vector<32x32xbf16>
    %cst = arith.constant dense<0.000000e+00> : vector<8x32xf32>
    %2 = tpu.matmul %0, %1, %cst {dimension_numbers = #tpu.dot_dimension_numbers<[1], [1], [0], [0], [0, 0, 1, 0], [], []>} : vector<8x32xbf16>, vector<32x32xbf16>, vector<8x32xf32> -> vector<8x32xf32>
    %c0_3 = arith.constant 0 : index
    %c0_4 = arith.constant 0 : index
    %3 = vector.load %arg3[%c0_3, %c0_4] : memref<1x32xf32, #tpu.memory_space<vmem>>, vector<1x32xf32>
    %4 = vector.broadcast %3 : vector<1x32xf32> to vector<8x32xf32>
    %5 = arith.addf %2, %4 : vector<8x32xf32>
    %cst_5 = arith.constant 0.000000e+00 : f32
    %6 = vector.broadcast %cst_5 : f32 to vector<8x32xf32>
    %7 = arith.maximumf %5, %6 : vector<8x32xf32>
    %8 = arith.truncf %7 : vector<8x32xf32> to vector<8x32xbf16>
    %c0_6 = arith.constant 0 : index
    %c0_7 = arith.constant 0 : index
    %9 = vector.load %arg4[%c0_6, %c0_7] : memref<128x32xbf16, #tpu.memory_space<vmem>>, vector<128x32xbf16>
    %cst_8 = arith.constant dense<0.000000e+00> : vector<8x128xf32>
    %10 = tpu.matmul %8, %9, %cst_8 {dimension_numbers = #tpu.dot_dimension_numbers<[1], [1], [0], [0], [0, 0, 1, 0], [], []>} : vector<8x32xbf16>, vector<128x32xbf16>, vector<8x128xf32> -> vector<8x128xf32>
    %c0_9 = arith.constant 0 : index
    %c0_10 = arith.constant 0 : index
    %11 = vector.load %arg5[%c0_9, %c0_10] : memref<1x128xf32, #tpu.memory_space<vmem>>, vector<1x128xf32>
    %12 = vector.broadcast %11 : vector<1x128xf32> to vector<8x128xf32>
    %13 = arith.addf %10, %12 : vector<8x128xf32>
    %c0_11 = arith.constant 0 : index
    %c0_12 = arith.constant 0 : index
    %14 = vector.load %arg6[%c0_11, %c0_12] : memref<8x128xf32, #tpu.memory_space<vmem>>, vector<8x128xf32>
    tpu.vector_store %arg6[%c0_11, %c0_12], %13 {strides = array<i32>} : memref<8x128xf32, #tpu.memory_space<vmem>>, vector<8x128xf32>,
    return
  }
  func.func @transform_0(%arg0: i32) -> (i32, i32) {
    %c0_i32 = arith.constant 0 : i32
    %c0_i32_0 = arith.constant 0 : i32
    return %arg0, %c0_i32 : i32, i32
  }
  func.func @transform_1(%arg0: i32) -> (i32, i32) {
    %c0_i32 = arith.constant 0 : i32
    %c0_i32_0 = arith.constant 0 : i32
    %c0_i32_1 = arith.constant 0 : i32
    return %c0_i32, %c0_i32_0 : i32, i32
  }
  func.func @transform_2(%arg0: i32) -> (i32, i32) {
    %c0_i32 = arith.constant 0 : i32
    %c0_i32_0 = arith.constant 0 : i32
    %c0_i32_1 = arith.constant 0 : i32
    return %c0_i32, %c0_i32_0 : i32, i32
  }
  func.func @transform_3(%arg0: i32) -> (i32, i32) {
    %c0_i32 = arith.constant 0 : i32
    %c0_i32_0 = arith.constant 0 : i32
    %c0_i32_1 = arith.constant 0 : i32
    return %c0_i32, %c0_i32_0 : i32, i32
  }
  func.func @transform_4(%arg0: i32) -> (i32, i32) {
    %c0_i32 = arith.constant 0 : i32
    %c0_i32_0 = arith.constant 0 : i32
    %c0_i32_1 = arith.constant 0 : i32
    return %c0_i32, %c0_i32_0 : i32, i32
  }
  func.func @transform_5(%arg0: i32) -> (i32, i32) {
    %c0_i32 = arith.constant 0 : i32
    %c0_i32_0 = arith.constant 0 : i32
    return %arg0, %c0_i32 : i32, i32
  }
}

</mosaic_0001>

<llo_original>
// kernel: tpu_custom_call.1
$region0: #{tpu_custom_call.1}
  #allocation0 [shape = 'u32[]', space=smem, size = 0x4, offset = 0x4, fixed_abs, tag = 'smem constant byte address 0x4 - core index']
  #allocation1 [shape = 'u32[144,128]{1,0:T(1,128)}', space=vmem, size = 0x12000, scoped, tag = 'internal scratch']
  %s0 = inlined_call_operand.vmem [shape: bf16[8,32], index: 0, kind: input, shape index: {}]
  %s1 = inlined_call_operand.vmem [shape: bf16[32,32], index: 1, kind: input, shape index: {}]
  %s2 = inlined_call_operand.vmem [shape: f32[1,32], index: 2, kind: input, shape index: {}]
  %s3 = inlined_call_operand.vmem [shape: bf16[128,32], index: 3, kind: input, shape index: {}]
  %s4 = inlined_call_operand.vmem [shape: f32[1,128], index: 4, kind: input, shape index: {}]
  %s5 = inlined_call_operand.hbm [shape: f32[8,128], index: 5, kind: output, shape index: {}]
  %s6 = sld [smem:[#allocation0]]
  $region30: #{tpu_custom_call.1} parent=0
    _
  %s8 = ssub.s32 1, %s6
  %s9 = scalar_select 0, %s8, %s6
  $region1: #{tpu_custom_call.1} parent=0
    #allocation2 [shape = 'u8[4096]{0}', space=vmem, size = 0x1000, scoped, tag = 'output window, operand 0, single buffered']
    #allocation3 [shape = 's32[1]{0}', space=sflag, size = 0x4, scoped, tag = 'scoped memory for tpu_custom_call.1']
    %10 = vsyncpa [#allocation3], 0
    // Predicated region
    $region2: #{tpu_custom_call.1} parent=1 // pred_check
      _
    $region3: #{tpu_custom_call.1} parent=1 // pred_check_branch
      %12 = sbr.rel (0) target = $region5
    $region4: #{tpu_custom_call.1} parent=1 // pred_region
      _
    $region5: #{tpu_custom_call.1} parent=1 // pred_fallthru
      _
    // Predicated region
    $region6: #{tpu_custom_call.1} parent=1 // pred_check
      _
    $region7: #{tpu_custom_call.1} parent=1 // pred_check_branch
      %14 = sbr.rel (0) target = $region9
    $region8: #{tpu_custom_call.1} parent=1 // pred_region
      _
    $region9: #{tpu_custom_call.1} parent=1 // pred_fallthru
      _
    // Predicated region
    $region10: #{tpu_custom_call.1} parent=1 // pred_check
      _
    $region11: #{tpu_custom_call.1} parent=1 // pred_check_branch
      %16 = sbr.rel (0) target = $region13
    $region12: #{tpu_custom_call.1} parent=1 // pred_region
      _
    $region13: #{tpu_custom_call.1} parent=1 // pred_fallthru
      _
    // Predicated region
    $region14: #{tpu_custom_call.1} parent=1 // pred_check
      _
    $region15: #{tpu_custom_call.1} parent=1 // pred_check_branch
      %18 = sbr.rel (0) target = $region17
    $region16: #{tpu_custom_call.1} parent=1 // pred_region
      _
    $region17: #{tpu_custom_call.1} parent=1 // pred_fallthru
      _
    // Predicated region
    $region18: #{tpu_custom_call.1} parent=1 // pred_check
      _
    $region19: #{tpu_custom_call.1} parent=1 // pred_check_branch
      %20 = sbr.rel (0) target = $region21
    $region20: #{tpu_custom_call.1} parent=1 // pred_region
      _
    $region21: #{tpu_custom_call.1} parent=1 // pred_fallthru
      _
    %v22 = vld [vmem:[%s0] sm:$0xf]
    %v23 = vld [vmem:[%s1] sm:$0xf]
    %v24 = vld [vmem:[%s1 + $0x4] sm:$0xf]
    %v25 = vld [vmem:[%s1 + $0x8] sm:$0xf]
    %v26 = vld [vmem:[%s1 + $0xc] sm:$0xf]
    %v27 = vld [vmem:[%s2] sm:$0x1]
    %v29 = vlaneseq
    %v30 = vshrl.u32 %v29, 7
    %v31 = vsub.s32 0, %v30
    %v32 = vrot.slane %v27, %v31
    %v38 = vunpack.c.l.b16 %v23
    %v39 = vunpack.c.l.b16 %v24
    %v40 = vunpack.c.l.b16 %v25
    %v41 = vunpack.c.l.b16 %v26
    %v42 = vpack.c.b16 %v39, %v38
    %v43 = vpack.c.b16 %v41, %v40
    %vm44 = vcmask 261120
    %v46 = vsel %vm44, %v22, 0
    %v49 = vsel %vm44, %v42, 0
    %v52 = vsel %vm44, %v43, 0
    %54 = vmatprep.subr.bf16.mxu0 0
    %55 = vmatpush1.bf16.xpose.msra.mxu0 0
    %56 = vmatprep.subr.bf16.mxu0 0
    %57 = vmatpush1.bf16.xpose.msra.mxu0 0
    %58 = vmatprep.subr.bf16.mxu0 0
    %59 = vmatpush1.bf16.xpose.msra.mxu0 0
    %60 = vmatprep.subr.bf16.mxu0 0
    %61 = vmatpush1.bf16.xpose.msra.mxu0 0
    %62 = vmatprep.subr.bf16.mxu0 0
    %63 = vmatpush1.bf16.xpose.msra.mxu0 0
    %64 = vmatprep.subr.bf16.mxu0 0
    %65 = vmatpush1.bf16.xpose.msra.mxu0 0
    %66 = vmatprep.subr.bf16.mxu0 0
    %67 = vmatpush1.bf16.xpose.msra.mxu0 %v52
    %68 = vmatprep.subr.bf16.mxu0 0
    %69 = vmatpush1.bf16.xpose.msra.mxu0 %v49
    %70 = vmatprep.subr.bf16.mxu0 0
    %71 = vmatpush2.bf16.xpose.msra.mxu0 0
    %72 = vmatprep.subr.bf16.mxu0 0
    %73 = vmatpush2.bf16.xpose.msra.mxu0 0
    %74 = vmatprep.subr.bf16.mxu0 0
    %75 = vmatpush2.bf16.xpose.msra.mxu0 0
    %76 = vmatprep.subr.bf16.mxu0 0
    %77 = vmatpush2.bf16.xpose.msra.mxu0 0
    %78 = vmatprep.subr.bf16.mxu0 0
    %79 = vmatpush2.bf16.xpose.msra.mxu0 0
    %80 = vmatprep.subr.bf16.mxu0 0
    %81 = vmatpush2.bf16.xpose.msra.mxu0 0
    %82 = vmatprep.subr.bf16.mxu0 0
    %83 = vmatpush2.bf16.xpose.msra.mxu0 0
    %84 = vmatprep.subr.bf16.mxu0 0
    %85 = vmatpush2.bf16.xpose.msra.mxu0 0
    %86 = vmatprep.mubr.bf16.mxu0 0
    %87 = vmatmul.mubr.bf16.gmra.mxu0 %v46
    %v88 = vpop.f32.mrf.mxu0
    %v89 = vadd.f32 %v32, %v88
    %v90 = vpop.f32.mrf.mxu0
    %v91 = vpop.f32.mrf.mxu0
    %v92 = vpop.f32.mrf.mxu0
    %93 = vdwg.mxu0
    %v94 = vmax.f32 %v89, 0.0
    %v95 = vpack.c.bf16 %v94, %v94
    %v96 = vld [vmem:[%s3] sm:$0xf]
    %v97 = vld [vmem:[%s3 + $0x4] sm:$0xf]
    %v98 = vld [vmem:[%s3 + $0x8] sm:$0xf]
    %v99 = vld [vmem:[%s3 + $0xc] sm:$0xf]
    %v100 = vld [vmem:[%s3 + $0x10] sm:$0xf]
    %v101 = vld [vmem:[%s3 + $0x14] sm:$0xf]
    %v102 = vld [vmem:[%s3 + $0x18] sm:$0xf]
    %v103 = vld [vmem:[%s3 + $0x1c] sm:$0xf]
    %v104 = vld [vmem:[%s3 + $0x20] sm:$0xf]
    %v105 = vld [vmem:[%s3 + $0x24] sm:$0xf]
    %v106 = vld [vmem:[%s3 + $0x28] sm:$0xf]
    %v107 = vld [vmem:[%s3 + $0x2c] sm:$0xf]
    %v108 = vld [vmem:[%s3 + $0x30] sm:$0xf]
    %v109 = vld [vmem:[%s3 + $0x34] sm:$0xf]
    %v110 = vld [vmem:[%s3 + $0x38] sm:$0xf]
    %v111 = vld [vmem:[%s3 + $0x3c] sm:$0xf]
    %v112 = vld [vmem:[%s4] sm:$0x1]
    %v114 = vlaneseq
    %v115 = vshrl.u32 %v114, 7
    %v116 = vsub.s32 0, %v115
    %v117 = vrot.slane %v112, %v116
    %v135 = vunpack.c.l.b16 %v96
    %v136 = vunpack.c.l.b16 %v97
    %v137 = vunpack.c.l.b16 %v98
    %v138 = vunpack.c.l.b16 %v99
    %v139 = vunpack.c.l.b16 %v100
    %v140 = vunpack.c.l.b16 %v101
    %v141 = vunpack.c.l.b16 %v102
    %v142 = vunpack.c.l.b16 %v103
    %v143 = vunpack.c.l.b16 %v104
    %v144 = vunpack.c.l.b16 %v105
    %v145 = vunpack.c.l.b16 %v106
    %v146 = vunpack.c.l.b16 %v107
    %v147 = vunpack.c.l.b16 %v108
    %v148 = vunpack.c.l.b16 %v109
    %v149 = vunpack.c.l.b16 %v110
    %v150 = vunpack.c.l.b16 %v111
    %v151 = vpack.c.b16 %v136, %v135
    %v152 = vpack.c.b16 %v138, %v137
    %v153 = vpack.c.b16 %v140, %v139
    %v154 = vpack.c.b16 %v142, %v141
    %v155 = vpack.c.b16 %v144, %v143
    %v156 = vpack.c.b16 %v146, %v145
    %v157 = vpack.c.b16 %v148, %v147
    %v158 = vpack.c.b16 %v150, %v149
    %v160 = vsel %vm44, %v95, 0
    %v163 = vsel %vm44, %v151, 0
    %v166 = vsel %vm44, %v152, 0
    %v169 = vsel %vm44, %v153, 0
    %v172 = vsel %vm44, %v154, 0
    %v175 = vsel %vm44, %v155, 0
    %v178 = vsel %vm44, %v156, 0
    %v181 = vsel %vm44, %v157, 0
    %v184 = vsel %vm44, %v158, 0
    %186 = vmatprep.subr.bf16.mxu0 0
    %187 = vmatpush1.bf16.xpose.msra.mxu0 %v184
    %188 = vmatprep.subr.bf16.mxu0 0
    %189 = vmatpush1.bf16.xpose.msra.mxu0 %v181
    %190 = vmatprep.subr.bf16.mxu0 0
    %191 = vmatpush1.bf16.xpose.msra.mxu0 %v178
    %192 = vmatprep.subr.bf16.mxu0 0
    %193 = vmatpush1.bf16.xpose.msra.mxu0 %v175
    %194 = vmatprep.subr.bf16.mxu0 0
    %195 = vmatpush1.bf16.xpose.msra.mxu0 %v172
    %196 = vmatprep.subr.bf16.mxu0 0
    %197 = vmatpush1.bf16.xpose.msra.mxu0 %v169
    %198 = vmatprep.subr.bf16.mxu0 0
    %199 = vmatpush1.bf16.xpose.msra.mxu0 %v166
    %200 = vmatprep.subr.bf16.mxu0 0
    %201 = vmatpush1.bf16.xpose.msra.mxu0 %v163
    %202 = vmatprep.subr.bf16.mxu0 0
    %203 = vmatpush2.bf16.xpose.msra.mxu0 0
    %204 = vmatprep.subr.bf16.mxu0 0
    %205 = vmatpush2.bf16.xpose.msra.mxu0 0
    %206 = vmatprep.subr.bf16.mxu0 0
    %207 = vmatpush2.bf16.xpose.msra.mxu0 0
    %208 = vmatprep.subr.bf16.mxu0 0
    %209 = vmatpush2.bf16.xpose.msra.mxu0 0
    %210 = vmatprep.subr.bf16.mxu0 0
    %211 = vmatpush2.bf16.xpose.msra.mxu0 0
    %212 = vmatprep.subr.bf16.mxu0 0
    %213 = vmatpush2.bf16.xpose.msra.mxu0 0
    %214 = vmatprep.subr.bf16.mxu0 0
    %215 = vmatpush2.bf16.xpose.msra.mxu0 0
    %216 = vmatprep.subr.bf16.mxu0 0
    %217 = vmatpush2.bf16.xpose.msra.mxu0 0
    %218 = vmatprep.mubr.bf16.mxu0 0
    %219 = vmatmul.mubr.bf16.gmra.mxu0 %v160
    %v220 = vpop.f32.mrf.mxu0
    %v221 = vadd.f32 %v117, %v220
    %v222 = vpop.f32.mrf.mxu0
    %v223 = vpop.f32.mrf.mxu0
    %v224 = vpop.f32.mrf.mxu0
    %225 = vdwg.mxu0
    %226 = vst [vmem:[#allocation2] sm:$0xff] %v221
    // Predicated region
    $region22: #{tpu_custom_call.1} parent=1 // pred_check
      _
    $region23: #{tpu_custom_call.1} parent=1 // pred_check_branch
      %228 = sbr.rel (0) target = $region25
    $region24: #{tpu_custom_call.1} parent=1 // pred_region
      %s230 = ssub.s32 128, 128
      %231 = vsyncadd [#allocation3], %s230
      %s233 = sshll.u32 [#allocation2], 4
      %s234 = int_to_ptr.vmem [resolvable:$true] %s233
      %236 = dma.vmem_to_hbm [thread:$0]  %s234, 128, %s5, [#allocation3]
    $region25: #{tpu_custom_call.1} parent=1 // pred_fallthru
      _
    // Predicated region
    $region26: #{tpu_custom_call.1} parent=1 // pred_check
      _
    $region27: #{tpu_custom_call.1} parent=1 // pred_check_branch
      %238 = sbr.rel (0) target = $region29
    $region28: #{tpu_custom_call.1} parent=1 // pred_region
      %239 = dma.done [#allocation3], 128
    $region29: #{tpu_custom_call.1} parent=1 // pred_fallthru
      _
    %240 = vsyncpa [#allocation3], 1

</llo_original>
